<compile_context>
chip_gen: v5e
topology: v5e:2x2
jax: 0.10.0
libtpu: 0.0.40
codegen_flags: <defaults>
</compile_context>

<pallas_src>
import jax
import jax.numpy as jnp
from jax.experimental import pallas as pl
from jax.experimental.pallas import tpu as pltpu

N_PAD = 128       # lane-dense output width (real logits live in [:, :11])
TB_MAX = 512      # max batch-tile rows (multiple of 8)


def fcn_small_kernel(inv_ref, x_ref, w1_ref, b1_ref, wt_ref, bt_ref, o_ref):
    # inv_ref: (1,1) f32 in SMEM = 1 / max(x) over the WHOLE batch.
    inv = inv_ref[0, 0]
    x = x_ref[...] * inv                                   # (TB, 256) f32

    # dense1 (256 -> 512) + ReLU; bf16 operands, f32 accumulate / epilogue.
    h = jnp.dot(x.astype(jnp.bfloat16), w1_ref[...],
                preferred_element_type=jnp.float32) + b1_ref[...]
    h = jnp.maximum(h, 0.0)

    # fused dense2..dense5 (512 -> 128 padded, real outputs in [:, :11]).
    out = jnp.dot(h.astype(jnp.bfloat16), wt_ref[...],
                  preferred_element_type=jnp.float32) + bt_ref[...]
    o_ref[...] = out


def prepare_params(params):
    """One-time prep: fold the linear tail, pad to 128 lanes, cast to bf16.

    Returns (prepped_tuple, n_out).  Call once; reuse the result for every
    forward call.
    """
    w1, b1, w2, b2, w3, b3, w4, b4, w5, b5 = params
    n_out = w5.shape[1]                                     # 11

    # Fold the purely-linear tail in f32 (exact up to fp reassociation).
    w_tail = w2 @ w3 @ w4 @ w5                              # (512, 11)
    b_tail = ((b2 @ w3 + b3) @ w4 + b4) @ w5 + b5           # (1, 11)

    # Zero-pad output columns 11 -> 128 so the final store is unmasked.
    w_tail_p = jnp.zeros((w_tail.shape[0], N_PAD), jnp.float32)
    w_tail_p = w_tail_p.at[:, :n_out].set(w_tail)
    b_tail_p = jnp.zeros((1, N_PAD), jnp.float32).at[:, :n_out].set(b_tail)

    # bf16 weights for the MXU / DMA path; biases stay f32.
    w1_bf = w1.astype(jnp.bfloat16)
    w_tail_bf = w_tail_p.astype(jnp.bfloat16)

    prepped = (w1_bf, b1, w_tail_bf, b_tail_p)
    prepped = jax.tree_util.tree_map(jax.block_until_ready, prepped)
    return prepped, n_out


def _round_up(n, m):
    return ((n + m - 1) // m) * m


@jax.jit
def fcn_small_forward_padded(x, prepped):
    """Forward pass; returns the lane-dense padded (B, 128) logits buffer.

    Consumers that need exactly 11 logits slice [:, :11] themselves (keeps
    the un-pad copy off the critical path).
    """
    w1_bf, b1, wt_bf, bt = prepped
    B = x.shape[0]

    # Global max over the *whole* batch, computed outside the kernel so the
    # result is identical regardless of batch tiling.  Pass its exact
    # reciprocal as a (1,1) SMEM scalar.
    inv_max = (1.0 / jnp.max(x)).reshape(1, 1).astype(jnp.float32)

    # Batch tile: multiple of 8, capped at TB_MAX.  Pad rows so every tile is
    # full -> unmasked (8,128)-aligned loads/stores.
    tb = min(TB_MAX, _round_up(B, 8))
    b_pad = _round_up(B, tb)
    if b_pad != B:
        x = jnp.pad(x, ((0, b_pad - B), (0, 0)))
    grid = (b_pad // tb,)

    out = pl.pallas_call(
        fcn_small_kernel,
        out_shape=jax.ShapeDtypeStruct((b_pad, N_PAD), jnp.float32),
        grid=grid,
        in_specs=[
            # 1/max scalar, whole array in SMEM.
            pl.BlockSpec(memory_space=pltpu.MemorySpace.SMEM),
            # x: tiled over the batch.
            pl.BlockSpec((tb, 256), lambda i: (i, 0)),
            # Weights / biases: constant index_map -> resident in VMEM.
            pl.BlockSpec((256, 512), lambda i: (0, 0)),
            pl.BlockSpec((1, 512), lambda i: (0, 0)),
            pl.BlockSpec((512, N_PAD), lambda i: (0, 0)),
            pl.BlockSpec((1, N_PAD), lambda i: (0, 0)),
        ],
        out_specs=pl.BlockSpec((tb, N_PAD), lambda i: (i, 0)),
        compiler_params=pltpu.CompilerParams(
            dimension_semantics=("parallel",)),
    )(inv_max, x, w1_bf, b1, wt_bf, bt)

    if b_pad != B:
        out = out[:B]
    return out


def init_linear_params(key, fan_in, fan_out):
    """PyTorch nn.Linear default init: U(-k, k), k = 1/sqrt(fan_in)."""
    kw, kb = jax.random.split(key)
    bound = 1.0 / jnp.sqrt(jnp.float32(fan_in))
    # stored as (in, out) so the kernel does x @ W
    w = jax.random.uniform(kw, (fan_in, fan_out), jnp.float32, -bound, bound)
    b = jax.random.uniform(kb, (1, fan_out), jnp.float32, -bound, bound)
    return w, b


def reference_forward(x, params):
    """Unfused f32 reference matching the PyTorch module semantics."""
    w1, b1, w2, b2, w3, b3, w4, b4, w5, b5 = params
    x = x / jnp.max(x)
    h = jnp.maximum(x @ w1 + b1, 0.0)
    h = h @ w2 + b2
    h = h @ w3 + b3
    h = h @ w4 + b4
    h = h @ w5 + b5
    return h


if __name__ == "__main__":
    key = jax.random.PRNGKey(0)
    k_x, k1, k2, k3, k4, k5 = jax.random.split(key, 6)

    B = 8
    x = jax.random.uniform(k_x, (B, 256), jnp.float32)

    layer_dims = [(256, 512), (512, 64), (64, 32), (32, 16), (16, 11)]
    layer_keys = [k1, k2, k3, k4, k5]
    params = []
    for k, (fi, fo) in zip(layer_keys, layer_dims):
        w, b = init_linear_params(k, fi, fo)
        params.extend([w, b])
    params = tuple(params)

    # One-time weight prep (fold / pad / bf16 cast) -- NOT per forward call.
    prepped, n_out = prepare_params(params)

    out_padded = jax.block_until_ready(fcn_small_forward_padded(x, prepped))
    # Consumer-side slice to the 11 real logits (only needed for the check).
    out = out_padded[:, :n_out]
    ref = jax.block_until_ready(reference_forward(x, params))

    assert out_padded.shape == (B, N_PAD), out_padded.shape
    assert out.shape == (B, n_out), out.shape
    assert jnp.allclose(out, ref, rtol=1e-2, atol=1e-2), (
        float(jnp.max(jnp.abs(out - ref))))

    print("KERNEL_OK")
</pallas_src>

<mosaic_0001>
module attributes {stable_mosaic.version = 11 : i64} {
  func.func @fcn_small_kernel(%arg0: i32, %arg1: memref<1x1xf32, #tpu.memory_space<smem>>, %arg2: memref<8x256xf32, #tpu.memory_space<vmem>>, %arg3: memref<256x512xbf16, #tpu.memory_space<vmem>>, %arg4: memref<1x512xf32, #tpu.memory_space<vmem>>, %arg5: memref<512x128xbf16, #tpu.memory_space<vmem>>, %arg6: memref<1x128xf32, #tpu.memory_space<vmem>>, %arg7: memref<8x128xf32, #tpu.memory_space<vmem>>) attributes {dimension_semantics = [#tpu.dimension_semantics<parallel>], iteration_bounds = array<i64: 1>, scalar_prefetch = 0 : i64, scratch_operands = 0 : i64, tpu.core_type = #tpu.core_type<tc>, window_params = [{transform_indices = @transform_0, window_bounds = array<i64: 1, 1>}, {transform_indices = @transform_1, window_bounds = array<i64: 8, 256>}, {pipeline_mode = #tpu.pipeline_mode<synchronous>, transform_indices = @transform_2, window_bounds = array<i64: 256, 512>}, {pipeline_mode = #tpu.pipeline_mode<synchronous>, transform_indices = @transform_3, window_bounds = array<i64: 1, 512>}, {pipeline_mode = #tpu.pipeline_mode<synchronous>, transform_indices = @transform_4, window_bounds = array<i64: 512, 128>}, {pipeline_mode = #tpu.pipeline_mode<synchronous>, transform_indices = @transform_5, window_bounds = array<i64: 1, 128>}, {transform_indices = @transform_6, window_bounds = array<i64: 8, 128>}]} {
    %c0 = arith.constant 0 : index
    %c0_0 = arith.constant 0 : index
    %0 = memref.load %arg1[%c0, %c0_0] : memref<1x1xf32, #tpu.memory_space<smem>>
    %c0_1 = arith.constant 0 : index
    %c0_2 = arith.constant 0 : index
    %1 = vector.load %arg2[%c0_1, %c0_2] : memref<8x256xf32, #tpu.memory_space<vmem>>, vector<8x256xf32>
    %2 = vector.broadcast %0 : f32 to vector<8x256xf32>
    %3 = arith.mulf %1, %2 : vector<8x256xf32>
    %4 = arith.truncf %3 : vector<8x256xf32> to vector<8x256xbf16>
    %c0_3 = arith.constant 0 : index
    %c0_4 = arith.constant 0 : index
    %5 = vector.load %arg3[%c0_3, %c0_4] : memref<256x512xbf16, #tpu.memory_space<vmem>>, vector<256x512xbf16>
    %cst = arith.constant dense<0.000000e+00> : vector<8x512xf32>
    %6 = tpu.matmul %4, %5, %cst {dimension_numbers = #tpu.dot_dimension_numbers<[1], [0], [0], [1], [0, 0, 1, 1], [], []>} : vector<8x256xbf16>, vector<256x512xbf16>, vector<8x512xf32> -> vector<8x512xf32>
    %c0_5 = arith.constant 0 : index
    %c0_6 = arith.constant 0 : index
    %7 = vector.load %arg4[%c0_5, %c0_6] : memref<1x512xf32, #tpu.memory_space<vmem>>, vector<1x512xf32>
    %8 = vector.broadcast %7 : vector<1x512xf32> to vector<8x512xf32>
    %9 = arith.addf %6, %8 : vector<8x512xf32>
    %cst_7 = arith.constant 0.000000e+00 : f32
    %10 = vector.broadcast %cst_7 : f32 to vector<8x512xf32>
    %11 = arith.maximumf %9, %10 : vector<8x512xf32>
    %12 = arith.truncf %11 : vector<8x512xf32> to vector<8x512xbf16>
    %c0_8 = arith.constant 0 : index
    %c0_9 = arith.constant 0 : index
    %13 = vector.load %arg5[%c0_8, %c0_9] : memref<512x128xbf16, #tpu.memory_space<vmem>>, vector<512x128xbf16>
    %cst_10 = arith.constant dense<0.000000e+00> : vector<8x128xf32>
    %14 = tpu.matmul %12, %13, %cst_10 {dimension_numbers = #tpu.dot_dimension_numbers<[1], [0], [0], [1], [0, 0, 1, 1], [], []>} : vector<8x512xbf16>, vector<512x128xbf16>, vector<8x128xf32> -> vector<8x128xf32>
    %c0_11 = arith.constant 0 : index
    %c0_12 = arith.constant 0 : index
    %15 = vector.load %arg6[%c0_11, %c0_12] : memref<1x128xf32, #tpu.memory_space<vmem>>, vector<1x128xf32>
    %16 = vector.broadcast %15 : vector<1x128xf32> to vector<8x128xf32>
    %17 = arith.addf %14, %16 : vector<8x128xf32>
    %c0_13 = arith.constant 0 : index
    %c0_14 = arith.constant 0 : index
    %18 = vector.load %arg7[%c0_13, %c0_14] : memref<8x128xf32, #tpu.memory_space<vmem>>, vector<8x128xf32>
    tpu.vector_store %arg7[%c0_13, %c0_14], %17 {strides = array<i32>} : memref<8x128xf32, #tpu.memory_space<vmem>>, vector<8x128xf32>,
    return
  }
  func.func @transform_0(%arg0: i32) -> (i32, i32) {
    %c0_i32 = arith.constant 0 : i32
    %c0_i32_0 = arith.constant 0 : i32
    %c0_i32_1 = arith.constant 0 : i32
    return %c0_i32, %c0_i32_0 : i32, i32
  }
  func.func @transform_1(%arg0: i32) -> (i32, i32) {
    %c0_i32 = arith.constant 0 : i32
    %c0_i32_0 = arith.constant 0 : i32
    return %arg0, %c0_i32 : i32, i32
  }
  func.func @transform_2(%arg0: i32) -> (i32, i32) {
    %c0_i32 = arith.constant 0 : i32
    %c0_i32_0 = arith.constant 0 : i32
    %c0_i32_1 = arith.constant 0 : i32
    return %c0_i32, %c0_i32_0 : i32, i32
  }
  func.func @transform_3(%arg0: i32) -> (i32, i32) {
    %c0_i32 = arith.constant 0 : i32
    %c0_i32_0 = arith.constant 0 : i32
    %c0_i32_1 = arith.constant 0 : i32
    return %c0_i32, %c0_i32_0 : i32, i32
  }
  func.func @transform_4(%arg0: i32) -> (i32, i32) {
    %c0_i32 = arith.constant 0 : i32
    %c0_i32_0 = arith.constant 0 : i32
    %c0_i32_1 = arith.constant 0 : i32
    return %c0_i32, %c0_i32_0 : i32, i32
  }
  func.func @transform_5(%arg0: i32) -> (i32, i32) {
    %c0_i32 = arith.constant 0 : i32
    %c0_i32_0 = arith.constant 0 : i32
    %c0_i32_1 = arith.constant 0 : i32
    return %c0_i32, %c0_i32_0 : i32, i32
  }
  func.func @transform_6(%arg0: i32) -> (i32, i32) {
    %c0_i32 = arith.constant 0 : i32
    %c0_i32_0 = arith.constant 0 : i32
    return %arg0, %c0_i32 : i32, i32
  }
}

</mosaic_0001>

<llo_original>
// kernel: fcn_small_forward_padded.1
$region0: #{fcn_small_forward_padded.1}
  #allocation0 [shape = 'u32[]', space=smem, size = 0x4, offset = 0x4, fixed_abs, tag = 'smem constant byte address 0x4 - core index']
  #allocation1 [shape = 'u32[72,128]{1,0:T(1,128)}', space=vmem, size = 0x9000, scoped, tag = 'internal scratch']
  #allocation2 [shape = 'f32[1,1]{1,0:T(1,128)S(6)}', space=smem, size = 0x200, scoped, tag = 'scoped memory for fcn_small_forward_padded.1']
  %s0 = inlined_call_operand.<no memory space> [shape: f32[1,1], index: 0, kind: input, shape index: {}]
  %s1 = inlined_call_operand.vmem [shape: f32[8,256], index: 1, kind: input, shape index: {}]
  %s2 = inlined_call_operand.hbm [shape: bf16[256,512], index: 2, kind: input, shape index: {}]
  %s3 = inlined_call_operand.vmem [shape: f32[1,512], index: 3, kind: input, shape index: {}]
  %s4 = inlined_call_operand.hbm [shape: bf16[512,128], index: 4, kind: input, shape index: {}]
  %s5 = inlined_call_operand.vmem [shape: f32[1,128], index: 5, kind: input, shape index: {}]
  %s6 = inlined_call_operand.hbm [shape: f32[8,128], index: 6, kind: output, shape index: {}]
  %s7 = sld [smem:[#allocation0]]
  $region42: #{fcn_small_forward_padded.1} parent=0
    _
  %s9 = ssub.s32 1, %s7
  %s10 = scalar_select 0, %s9, %s7
  %11 = sst [smem:[#allocation2]] %s0
  $region1: #{fcn_small_forward_padded.1} parent=0
    #allocation3 [shape = 'u8[262144]{0}', space=vmem, size = 0x40000, scoped, tag = 'input window, operand 2, single buffered']
    #allocation4 [shape = 's32[1]{0}', space=sflag, size = 0x4, scoped, tag = 'scoped memory for fcn_small_forward_padded.1']
    #allocation5 [shape = 's32[1]{0}', space=sflag, size = 0x4, scoped, tag = 'scoped memory for fcn_small_forward_padded.1']
    #allocation6 [shape = 'u8[131072]{0}', space=vmem, size = 0x20000, scoped, tag = 'input window, operand 4, single buffered']
    #allocation7 [shape = 's32[1]{0}', space=sflag, size = 0x4, scoped, tag = 'scoped memory for fcn_small_forward_padded.1']
    #allocation8 [shape = 'u8[4096]{0}', space=vmem, size = 0x1000, scoped, tag = 'output window, operand 0, single buffered']
    %12 = vsyncpa [#allocation4], 0
    %13 = vsyncpa [#allocation7], 0
    %14 = vsyncpa [#allocation5], 0
    // Predicated region
    $region2: #{fcn_small_forward_padded.1} parent=1 // pred_check
      _
    $region3: #{fcn_small_forward_padded.1} parent=1 // pred_check_branch
      %16 = sbr.rel (0) target = $region5
    $region4: #{fcn_small_forward_padded.1} parent=1 // pred_region
      _
    $region5: #{fcn_small_forward_padded.1} parent=1 // pred_fallthru
      _
    // Predicated region
    $region6: #{fcn_small_forward_padded.1} parent=1 // pred_check
      _
    $region7: #{fcn_small_forward_padded.1} parent=1 // pred_check_branch
      %18 = sbr.rel (0) target = $region9
    $region8: #{fcn_small_forward_padded.1} parent=1 // pred_region
      _
    $region9: #{fcn_small_forward_padded.1} parent=1 // pred_fallthru
      _
    // Predicated region
    $region10: #{fcn_small_forward_padded.1} parent=1 // pred_check
      _
    $region11: #{fcn_small_forward_padded.1} parent=1 // pred_check_branch
      %20 = sbr.rel (0) target = $region13
    $region12: #{fcn_small_forward_padded.1} parent=1 // pred_region
      %22 = vsyncadd [#allocation4], 0
      %s23 = sshll.u32 %s2, 4
      %s24 = int_to_ptr.hbm [resolvable:$true] %s23
      %s25 = sshll.u32 [#allocation3], 4
      %s26 = int_to_ptr.vmem [resolvable:$true] %s25
      %31 = dma.hbm_to_vmem [thread:$0]  %s24, 8192, %s26, [#allocation4], 256, 256, 16
    $region13: #{fcn_small_forward_padded.1} parent=1 // pred_fallthru
      _
    // Predicated region
    $region14: #{fcn_small_forward_padded.1} parent=1 // pred_check
      _
    $region15: #{fcn_small_forward_padded.1} parent=1 // pred_check_branch
      %33 = sbr.rel (0) target = $region17
    $region16: #{fcn_small_forward_padded.1} parent=1 // pred_region
      _
    $region17: #{fcn_small_forward_padded.1} parent=1 // pred_fallthru
      _
    // Predicated region
    $region18: #{fcn_small_forward_padded.1} parent=1 // pred_check
      _
    $region19: #{fcn_small_forward_padded.1} parent=1 // pred_check_branch
      %35 = sbr.rel (0) target = $region21
    $region20: #{fcn_small_forward_padded.1} parent=1 // pred_region
      %37 = vsyncadd [#allocation7], 0
      %s38 = sshll.u32 %s4, 4
      %s39 = int_to_ptr.hbm [resolvable:$true] %s38
      %s40 = sshll.u32 [#allocation6], 4
      %s41 = int_to_ptr.vmem [resolvable:$true] %s40
      %46 = dma.hbm_to_vmem [thread:$0]  %s39, 4096, %s41, [#allocation7], 64, 64, 4
    $region21: #{fcn_small_forward_padded.1} parent=1 // pred_fallthru
      _
    // Predicated region
    $region22: #{fcn_small_forward_padded.1} parent=1 // pred_check
      _
    $region23: #{fcn_small_forward_padded.1} parent=1 // pred_check_branch
      %48 = sbr.rel (0) target = $region25
    $region24: #{fcn_small_forward_padded.1} parent=1 // pred_region
      _
    $region25: #{fcn_small_forward_padded.1} parent=1 // pred_fallthru
      _
    // Predicated region
    $region26: #{fcn_small_forward_padded.1} parent=1 // pred_check
      _
    $region27: #{fcn_small_forward_padded.1} parent=1 // pred_check_branch
      %50 = sbr.rel (0) target = $region29
    $region28: #{fcn_small_forward_padded.1} parent=1 // pred_region
      %52 = dma.done [#allocation4], 8192
    $region29: #{fcn_small_forward_padded.1} parent=1 // pred_fallthru
      _
    // Predicated region
    $region30: #{fcn_small_forward_padded.1} parent=1 // pred_check
      _
    $region31: #{fcn_small_forward_padded.1} parent=1 // pred_check_branch
      %54 = sbr.rel (0) target = $region33
    $region32: #{fcn_small_forward_padded.1} parent=1 // pred_region
      %56 = dma.done [#allocation7], 4096
    $region33: #{fcn_small_forward_padded.1} parent=1 // pred_fallthru
      _
    %s57 = sld [smem:[#allocation2]]
    %v58 = vld [vmem:[%s1] sm:$0xff]
    %v59 = vld [vmem:[%s1 + $0x8] sm:$0xff]
    %v60 = vstv %s57
    %v61 = vmul.f32 %v58, %v60
    %v62 = vmul.f32 %v59, %v60
    %v63 = vpack.c.bf16 %v61, %v61
    %v64 = vpack.c.bf16 %v62, %v62
    %v65 = vld [vmem:[#allocation3] sm:$0xff]
    %v66 = vld [vmem:[#allocation3 + $0x8] sm:$0xff]
    %v67 = vld [vmem:[#allocation3 + $0x10] sm:$0xff]
    %v68 = vld [vmem:[#allocation3 + $0x18] sm:$0xff]
    %v69 = vld [vmem:[#allocation3 + $0x20] sm:$0xff]
    %v70 = vld [vmem:[#allocation3 + $0x28] sm:$0xff]
    %v71 = vld [vmem:[#allocation3 + $0x30] sm:$0xff]
    %v72 = vld [vmem:[#allocation3 + $0x38] sm:$0xff]
    %v73 = vld [vmem:[#allocation3 + $0x40] sm:$0xff]
    %v74 = vld [vmem:[#allocation3 + $0x48] sm:$0xff]
    %v75 = vld [vmem:[#allocation3 + $0x50] sm:$0xff]
    %v76 = vld [vmem:[#allocation3 + $0x58] sm:$0xff]
    %v77 = vld [vmem:[#allocation3 + $0x60] sm:$0xff]
    %v78 = vld [vmem:[#allocation3 + $0x68] sm:$0xff]
    %v79 = vld [vmem:[#allocation3 + $0x70] sm:$0xff]
    %v80 = vld [vmem:[#allocation3 + $0x78] sm:$0xff]
    %v81 = vld [vmem:[#allocation3 + $0x80] sm:$0xff]
    %v82 = vld [vmem:[#allocation3 + $0x88] sm:$0xff]
    %v83 = vld [vmem:[#allocation3 + $0x90] sm:$0xff]
    %v84 = vld [vmem:[#allocation3 + $0x98] sm:$0xff]
    %v85 = vld [vmem:[#allocation3 + $0xa0] sm:$0xff]
    %v86 = vld [vmem:[#allocation3 + $0xa8] sm:$0xff]
    %v87 = vld [vmem:[#allocation3 + $0xb0] sm:$0xff]
    %v88 = vld [vmem:[#allocation3 + $0xb8] sm:$0xff]
    %v89 = vld [vmem:[#allocation3 + $0xc0] sm:$0xff]
    %v90 = vld [vmem:[#allocation3 + $0xc8] sm:$0xff]
    %v91 = vld [vmem:[#allocation3 + $0xd0] sm:$0xff]
    %v92 = vld [vmem:[#allocation3 + $0xd8] sm:$0xff]
    %v93 = vld [vmem:[#allocation3 + $0xe0] sm:$0xff]
    %v94 = vld [vmem:[#allocation3 + $0xe8] sm:$0xff]
    %v95 = vld [vmem:[#allocation3 + $0xf0] sm:$0xff]
    %v96 = vld [vmem:[#allocation3 + $0xf8] sm:$0xff]
    %v97 = vld [vmem:[#allocation3 + $0x100] sm:$0xff]
    %v98 = vld [vmem:[#allocation3 + $0x108] sm:$0xff]
    %v99 = vld [vmem:[#allocation3 + $0x110] sm:$0xff]
    %v100 = vld [vmem:[#allocation3 + $0x118] sm:$0xff]
    %v101 = vld [vmem:[#allocation3 + $0x120] sm:$0xff]
    %v102 = vld [vmem:[#allocation3 + $0x128] sm:$0xff]
    %v103 = vld [vmem:[#allocation3 + $0x130] sm:$0xff]
    %v104 = vld [vmem:[#allocation3 + $0x138] sm:$0xff]
    %v105 = vld [vmem:[#allocation3 + $0x140] sm:$0xff]
    %v106 = vld [vmem:[#allocation3 + $0x148] sm:$0xff]
    %v107 = vld [vmem:[#allocation3 + $0x150] sm:$0xff]
    %v108 = vld [vmem:[#allocation3 + $0x158] sm:$0xff]
    %v109 = vld [vmem:[#allocation3 + $0x160] sm:$0xff]
    %v110 = vld [vmem:[#allocation3 + $0x168] sm:$0xff]
    %v111 = vld [vmem:[#allocation3 + $0x170] sm:$0xff]
    %v112 = vld [vmem:[#allocation3 + $0x178] sm:$0xff]
    %v113 = vld [vmem:[#allocation3 + $0x180] sm:$0xff]
    %v114 = vld [vmem:[#allocation3 + $0x188] sm:$0xff]
    %v115 = vld [vmem:[#allocation3 + $0x190] sm:$0xff]
    %v116 = vld [vmem:[#allocation3 + $0x198] sm:$0xff]
    %v117 = vld [vmem:[#allocation3 + $0x1a0] sm:$0xff]
    %v118 = vld [vmem:[#allocation3 + $0x1a8] sm:$0xff]
    %v119 = vld [vmem:[#allocation3 + $0x1b0] sm:$0xff]
    %v120 = vld [vmem:[#allocation3 + $0x1b8] sm:$0xff]
    %v121 = vld [vmem:[#allocation3 + $0x1c0] sm:$0xff]
    %v122 = vld [vmem:[#allocation3 + $0x1c8] sm:$0xff]
    %v123 = vld [vmem:[#allocation3 + $0x1d0] sm:$0xff]
    %v124 = vld [vmem:[#allocation3 + $0x1d8] sm:$0xff]
    %v125 = vld [vmem:[#allocation3 + $0x1e0] sm:$0xff]
    %v126 = vld [vmem:[#allocation3 + $0x1e8] sm:$0xff]
    %v127 = vld [vmem:[#allocation3 + $0x1f0] sm:$0xff]
    %v128 = vld [vmem:[#allocation3 + $0x1f8] sm:$0xff]
    %v129 = vld [vmem:[%s3] sm:$0xf]
    %v131 = vperm.slane %v129, 0
    %v132 = vperm.slane %v129, 1
    %v133 = vperm.slane %v129, 2
    %v134 = vperm.slane %v129, 3
    %v203 = vunpack.c.l.b16 %v65
    %v204 = vunpack.c.h.b16 %v65
    %v205 = vunpack.c.l.b16 %v66
    %v206 = vunpack.c.h.b16 %v66
    %v207 = vunpack.c.l.b16 %v67
    %v208 = vunpack.c.h.b16 %v67
    %v209 = vunpack.c.l.b16 %v68
    %v210 = vunpack.c.h.b16 %v68
    %v211 = vunpack.c.l.b16 %v69
    %v212 = vunpack.c.h.b16 %v69
    %v213 = vunpack.c.l.b16 %v70
    %v214 = vunpack.c.h.b16 %v70
    %v215 = vunpack.c.l.b16 %v71
    %v216 = vunpack.c.h.b16 %v71
    %v217 = vunpack.c.l.b16 %v72
    %v218 = vunpack.c.h.b16 %v72
    %v219 = vunpack.c.l.b16 %v73
    %v220 = vunpack.c.h.b16 %v73
    %v221 = vunpack.c.l.b16 %v74
    %v222 = vunpack.c.h.b16 %v74
    %v223 = vunpack.c.l.b16 %v75
    %v224 = vunpack.c.h.b16 %v75
    %v225 = vunpack.c.l.b16 %v76
    %v226 = vunpack.c.h.b16 %v76
    %v227 = vunpack.c.l.b16 %v77
    %v228 = vunpack.c.h.b16 %v77
    %v229 = vunpack.c.l.b16 %v78
    %v230 = vunpack.c.h.b16 %v78
    %v231 = vunpack.c.l.b16 %v79
    %v232 = vunpack.c.h.b16 %v79
    %v233 = vunpack.c.l.b16 %v80
    %v234 = vunpack.c.h.b16 %v80
    %v235 = vunpack.c.l.b16 %v81
    %v236 = vunpack.c.h.b16 %v81
    %v237 = vunpack.c.l.b16 %v82
    %v238 = vunpack.c.h.b16 %v82
    %v239 = vunpack.c.l.b16 %v83
    %v240 = vunpack.c.h.b16 %v83
    %v241 = vunpack.c.l.b16 %v84
    %v242 = vunpack.c.h.b16 %v84
    %v243 = vunpack.c.l.b16 %v85
    %v244 = vunpack.c.h.b16 %v85
    %v245 = vunpack.c.l.b16 %v86
    %v246 = vunpack.c.h.b16 %v86
    %v247 = vunpack.c.l.b16 %v87
    %v248 = vunpack.c.h.b16 %v87
    %v249 = vunpack.c.l.b16 %v88
    %v250 = vunpack.c.h.b16 %v88
    %v251 = vunpack.c.l.b16 %v89
    %v252 = vunpack.c.h.b16 %v89
    %v253 = vunpack.c.l.b16 %v90
    %v254 = vunpack.c.h.b16 %v90
    %v255 = vunpack.c.l.b16 %v91
    %v256 = vunpack.c.h.b16 %v91
    %v257 = vunpack.c.l.b16 %v92
    %v258 = vunpack.c.h.b16 %v92
    %v259 = vunpack.c.l.b16 %v93
    %v260 = vunpack.c.h.b16 %v93
    %v261 = vunpack.c.l.b16 %v94
    %v262 = vunpack.c.h.b16 %v94
    %v263 = vunpack.c.l.b16 %v95
    %v264 = vunpack.c.h.b16 %v95
    %v265 = vunpack.c.l.b16 %v96
    %v266 = vunpack.c.h.b16 %v96
    %v267 = vunpack.c.l.b16 %v97
    %v268 = vunpack.c.h.b16 %v97
    %v269 = vunpack.c.l.b16 %v98
    %v270 = vunpack.c.h.b16 %v98
    %v271 = vunpack.c.l.b16 %v99
    %v272 = vunpack.c.h.b16 %v99
    %v273 = vunpack.c.l.b16 %v100
    %v274 = vunpack.c.h.b16 %v100
    %v275 = vunpack.c.l.b16 %v101
    %v276 = vunpack.c.h.b16 %v101
    %v277 = vunpack.c.l.b16 %v102
    %v278 = vunpack.c.h.b16 %v102
    %v279 = vunpack.c.l.b16 %v103
    %v280 = vunpack.c.h.b16 %v103
    %v281 = vunpack.c.l.b16 %v104
    %v282 = vunpack.c.h.b16 %v104
    %v283 = vunpack.c.l.b16 %v105
    %v284 = vunpack.c.h.b16 %v105
    %v285 = vunpack.c.l.b16 %v106
    %v286 = vunpack.c.h.b16 %v106
    %v287 = vunpack.c.l.b16 %v107
    %v288 = vunpack.c.h.b16 %v107
    %v289 = vunpack.c.l.b16 %v108
    %v290 = vunpack.c.h.b16 %v108
    %v291 = vunpack.c.l.b16 %v109
    %v292 = vunpack.c.h.b16 %v109
    %v293 = vunpack.c.l.b16 %v110
    %v294 = vunpack.c.h.b16 %v110
    %v295 = vunpack.c.l.b16 %v111
    %v296 = vunpack.c.h.b16 %v111
    %v297 = vunpack.c.l.b16 %v112
    %v298 = vunpack.c.h.b16 %v112
    %v299 = vunpack.c.l.b16 %v113
    %v300 = vunpack.c.h.b16 %v113
    %v301 = vunpack.c.l.b16 %v114
    %v302 = vunpack.c.h.b16 %v114
    %v303 = vunpack.c.l.b16 %v115
    %v304 = vunpack.c.h.b16 %v115
    %v305 = vunpack.c.l.b16 %v116
    %v306 = vunpack.c.h.b16 %v116
    %v307 = vunpack.c.l.b16 %v117
    %v308 = vunpack.c.h.b16 %v117
    %v309 = vunpack.c.l.b16 %v118
    %v310 = vunpack.c.h.b16 %v118
    %v311 = vunpack.c.l.b16 %v119
    %v312 = vunpack.c.h.b16 %v119
    %v313 = vunpack.c.l.b16 %v120
    %v314 = vunpack.c.h.b16 %v120
    %v315 = vunpack.c.l.b16 %v121
    %v316 = vunpack.c.h.b16 %v121
    %v317 = vunpack.c.l.b16 %v122
    %v318 = vunpack.c.h.b16 %v122
    %v319 = vunpack.c.l.b16 %v123
    %v320 = vunpack.c.h.b16 %v123
    %v321 = vunpack.c.l.b16 %v124
    %v322 = vunpack.c.h.b16 %v124
    %v323 = vunpack.c.l.b16 %v125
    %v324 = vunpack.c.h.b16 %v125
    %v325 = vunpack.c.l.b16 %v126
    %v326 = vunpack.c.h.b16 %v126
    %v327 = vunpack.c.l.b16 %v127
    %v328 = vunpack.c.h.b16 %v127
    %v329 = vunpack.c.l.b16 %v128
    %v330 = vunpack.c.h.b16 %v128
    %v331 = vpack.c.b16 %v207, %v203
    %v332 = vpack.c.b16 %v208, %v204
    %v333 = vpack.c.b16 %v209, %v205
    %v334 = vpack.c.b16 %v210, %v206
    %v335 = vpack.c.b16 %v215, %v211
    %v336 = vpack.c.b16 %v216, %v212
    %v337 = vpack.c.b16 %v217, %v213
    %v338 = vpack.c.b16 %v218, %v214
    %v339 = vpack.c.b16 %v223, %v219
    %v340 = vpack.c.b16 %v224, %v220
    %v341 = vpack.c.b16 %v225, %v221
    %v342 = vpack.c.b16 %v226, %v222
    %v343 = vpack.c.b16 %v231, %v227
    %v344 = vpack.c.b16 %v232, %v228
    %v345 = vpack.c.b16 %v233, %v229
    %v346 = vpack.c.b16 %v234, %v230
    %v347 = vpack.c.b16 %v239, %v235
    %v348 = vpack.c.b16 %v240, %v236
    %v349 = vpack.c.b16 %v241, %v237
    %v350 = vpack.c.b16 %v242, %v238
    %v351 = vpack.c.b16 %v247, %v243
    %v352 = vpack.c.b16 %v248, %v244
    %v353 = vpack.c.b16 %v249, %v245
    %v354 = vpack.c.b16 %v250, %v246
    %v355 = vpack.c.b16 %v255, %v251
    %v356 = vpack.c.b16 %v256, %v252
    %v357 = vpack.c.b16 %v257, %v253
    %v358 = vpack.c.b16 %v258, %v254
    %v359 = vpack.c.b16 %v263, %v259
    %v360 = vpack.c.b16 %v264, %v260
    %v361 = vpack.c.b16 %v265, %v261
    %v362 = vpack.c.b16 %v266, %v262
    %v363 = vpack.c.b16 %v271, %v267
    %v364 = vpack.c.b16 %v272, %v268
    %v365 = vpack.c.b16 %v273, %v269
    %v366 = vpack.c.b16 %v274, %v270
    %v367 = vpack.c.b16 %v279, %v275
    %v368 = vpack.c.b16 %v280, %v276
    %v369 = vpack.c.b16 %v281, %v277
    %v370 = vpack.c.b16 %v282, %v278
    %v371 = vpack.c.b16 %v287, %v283
    %v372 = vpack.c.b16 %v288, %v284
    %v373 = vpack.c.b16 %v289, %v285
    %v374 = vpack.c.b16 %v290, %v286
    %v375 = vpack.c.b16 %v295, %v291
    %v376 = vpack.c.b16 %v296, %v292
    %v377 = vpack.c.b16 %v297, %v293
    %v378 = vpack.c.b16 %v298, %v294
    %v379 = vpack.c.b16 %v303, %v299
    %v380 = vpack.c.b16 %v304, %v300
    %v381 = vpack.c.b16 %v305, %v301
    %v382 = vpack.c.b16 %v306, %v302
    %v383 = vpack.c.b16 %v311, %v307
    %v384 = vpack.c.b16 %v312, %v308
    %v385 = vpack.c.b16 %v313, %v309
    %v386 = vpack.c.b16 %v314, %v310
    %v387 = vpack.c.b16 %v319, %v315
    %v388 = vpack.c.b16 %v320, %v316
    %v389 = vpack.c.b16 %v321, %v317
    %v390 = vpack.c.b16 %v322, %v318
    %v391 = vpack.c.b16 %v327, %v323
    %v392 = vpack.c.b16 %v328, %v324
    %v393 = vpack.c.b16 %v329, %v325
    %v394 = vpack.c.b16 %v330, %v326
    %459 = vmatpush.bf16.msra.mxu0 %v359
    %460 = vmatpush.bf16.msra.mxu0 %v355
    %461 = vmatpush.bf16.msra.mxu0 %v351
    %462 = vmatpush.bf16.msra.mxu0 %v347
    %463 = vmatpush.bf16.msra.mxu0 %v343
    %464 = vmatpush.bf16.msra.mxu0 %v339
    %465 = vmatpush.bf16.msra.mxu0 %v335
    %466 = vmatpush.bf16.msra.mxu0 %v331
    %467 = vmatmul.bf16.gmra.mxu0 %v63
    %v468 = vpop.f32.mrf.mxu0
    %v469 = vadd.f32 %v131, %v468
    %v470 = vpop.f32.mrf.mxu0
    %471 = vdwg.mxu0
    %472 = vmatpush.bf16.msra.mxu0 %v391
    %473 = vmatpush.bf16.msra.mxu0 %v387
    %474 = vmatpush.bf16.msra.mxu0 %v383
    %475 = vmatpush.bf16.msra.mxu0 %v379
    %476 = vmatpush.bf16.msra.mxu0 %v375
    %477 = vmatpush.bf16.msra.mxu0 %v371
    %478 = vmatpush.bf16.msra.mxu0 %v367
    %479 = vmatpush.bf16.msra.mxu0 %v363
    %480 = vmatmul.bf16.gmra.mxu0 %v64
    %v481 = vpop.f32.mrf.mxu0
    %v482 = vadd.f32 %v469, %v481
    %v483 = vpop.f32.mrf.mxu0
    %484 = vdwg.mxu0
    %485 = vmatpush.bf16.msra.mxu0 %v360
    %486 = vmatpush.bf16.msra.mxu0 %v356
    %487 = vmatpush.bf16.msra.mxu0 %v352
    %488 = vmatpush.bf16.msra.mxu0 %v348
    %489 = vmatpush.bf16.msra.mxu0 %v344
    %490 = vmatpush.bf16.msra.mxu0 %v340
    %491 = vmatpush.bf16.msra.mxu0 %v336
    %492 = vmatpush.bf16.msra.mxu0 %v332
    %493 = vmatmul.bf16.gmra.mxu0 %v63
    %v494 = vpop.f32.mrf.mxu0
    %v495 = vadd.f32 %v132, %v494
    %v496 = vpop.f32.mrf.mxu0
    %497 = vdwg.mxu0
    %498 = vmatpush.bf16.msra.mxu0 %v392
    %499 = vmatpush.bf16.msra.mxu0 %v388
    %500 = vmatpush.bf16.msra.mxu0 %v384
    %501 = vmatpush.bf16.msra.mxu0 %v380
    %502 = vmatpush.bf16.msra.mxu0 %v376
    %503 = vmatpush.bf16.msra.mxu0 %v372
    %504 = vmatpush.bf16.msra.mxu0 %v368
    %505 = vmatpush.bf16.msra.mxu0 %v364
    %506 = vmatmul.bf16.gmra.mxu0 %v64
    %v507 = vpop.f32.mrf.mxu0
    %v508 = vadd.f32 %v495, %v507
    %v509 = vpop.f32.mrf.mxu0
    %510 = vdwg.mxu0
    %511 = vmatpush.bf16.msra.mxu0 %v361
    %512 = vmatpush.bf16.msra.mxu0 %v357
    %513 = vmatpush.bf16.msra.mxu0 %v353
    %514 = vmatpush.bf16.msra.mxu0 %v349
    %515 = vmatpush.bf16.msra.mxu0 %v345
    %516 = vmatpush.bf16.msra.mxu0 %v341
    %517 = vmatpush.bf16.msra.mxu0 %v337
    %518 = vmatpush.bf16.msra.mxu0 %v333
    %519 = vmatmul.bf16.gmra.mxu0 %v63
    %v520 = vpop.f32.mrf.mxu0
    %v521 = vadd.f32 %v133, %v520
    %v522 = vpop.f32.mrf.mxu0
    %523 = vdwg.mxu0
    %524 = vmatpush.bf16.msra.mxu0 %v393
    %525 = vmatpush.bf16.msra.mxu0 %v389
    %526 = vmatpush.bf16.msra.mxu0 %v385
    %527 = vmatpush.bf16.msra.mxu0 %v381
    %528 = vmatpush.bf16.msra.mxu0 %v377
    %529 = vmatpush.bf16.msra.mxu0 %v373
    %530 = vmatpush.bf16.msra.mxu0 %v369
    %531 = vmatpush.bf16.msra.mxu0 %v365
    %532 = vmatmul.bf16.gmra.mxu0 %v64
    %v533 = vpop.f32.mrf.mxu0
    %v534 = vadd.f32 %v521, %v533
    %v535 = vpop.f32.mrf.mxu0
    %536 = vdwg.mxu0
    %537 = vmatpush.bf16.msra.mxu0 %v362
    %538 = vmatpush.bf16.msra.mxu0 %v358
    %539 = vmatpush.bf16.msra.mxu0 %v354
    %540 = vmatpush.bf16.msra.mxu0 %v350
    %541 = vmatpush.bf16.msra.mxu0 %v346
    %542 = vmatpush.bf16.msra.mxu0 %v342
    %543 = vmatpush.bf16.msra.mxu0 %v338
    %544 = vmatpush.bf16.msra.mxu0 %v334
    %545 = vmatmul.bf16.gmra.mxu0 %v63
    %v546 = vpop.f32.mrf.mxu0
    %v547 = vadd.f32 %v134, %v546
    %v548 = vpop.f32.mrf.mxu0
    %549 = vdwg.mxu0
    %550 = vmatpush.bf16.msra.mxu0 %v394
    %551 = vmatpush.bf16.msra.mxu0 %v390
    %552 = vmatpush.bf16.msra.mxu0 %v386
    %553 = vmatpush.bf16.msra.mxu0 %v382
    %554 = vmatpush.bf16.msra.mxu0 %v378
    %555 = vmatpush.bf16.msra.mxu0 %v374
    %556 = vmatpush.bf16.msra.mxu0 %v370
    %557 = vmatpush.bf16.msra.mxu0 %v366
    %558 = vmatmul.bf16.gmra.mxu0 %v64
    %v559 = vpop.f32.mrf.mxu0
    %v560 = vadd.f32 %v547, %v559
    %v561 = vpop.f32.mrf.mxu0
    %562 = vdwg.mxu0
    %v563 = vmax.f32 %v482, 0.0
    %v564 = vmax.f32 %v508, 0.0
    %v565 = vmax.f32 %v534, 0.0
    %v566 = vmax.f32 %v560, 0.0
    %v567 = vpack.c.bf16 %v563, %v563
    %v568 = vpack.c.bf16 %v564, %v564
    %v569 = vpack.c.bf16 %v565, %v565
    %v570 = vpack.c.bf16 %v566, %v566
    %v571 = vld [vmem:[#allocation6] sm:$0xf]
    %v572 = vld [vmem:[#allocation6 + $0x4] sm:$0xf]
    %v573 = vld [vmem:[#allocation6 + $0x8] sm:$0xf]
    %v574 = vld [vmem:[#allocation6 + $0xc] sm:$0xf]
    %v575 = vld [vmem:[#allocation6 + $0x10] sm:$0xf]
    %v576 = vld [vmem:[#allocation6 + $0x14] sm:$0xf]
    %v577 = vld [vmem:[#allocation6 + $0x18] sm:$0xf]
    %v578 = vld [vmem:[#allocation6 + $0x1c] sm:$0xf]
    %v579 = vld [vmem:[#allocation6 + $0x20] sm:$0xf]
    %v580 = vld [vmem:[#allocation6 + $0x24] sm:$0xf]
    %v581 = vld [vmem:[#allocation6 + $0x28] sm:$0xf]
    %v582 = vld [vmem:[#allocation6 + $0x2c] sm:$0xf]
    %v583 = vld [vmem:[#allocation6 + $0x30] sm:$0xf]
    %v584 = vld [vmem:[#allocation6 + $0x34] sm:$0xf]
    %v585 = vld [vmem:[#allocation6 + $0x38] sm:$0xf]
    %v586 = vld [vmem:[#allocation6 + $0x3c] sm:$0xf]
    %v587 = vld [vmem:[#allocation6 + $0x40] sm:$0xf]
    %v588 = vld [vmem:[#allocation6 + $0x44] sm:$0xf]
    %v589 = vld [vmem:[#allocation6 + $0x48] sm:$0xf]
    %v590 = vld [vmem:[#allocation6 + $0x4c] sm:$0xf]
    %v591 = vld [vmem:[#allocation6 + $0x50] sm:$0xf]
    %v592 = vld [vmem:[#allocation6 + $0x54] sm:$0xf]
    %v593 = vld [vmem:[#allocation6 + $0x58] sm:$0xf]
    %v594 = vld [vmem:[#allocation6 + $0x5c] sm:$0xf]
    %v595 = vld [vmem:[#allocation6 + $0x60] sm:$0xf]
    %v596 = vld [vmem:[#allocation6 + $0x64] sm:$0xf]
    %v597 = vld [vmem:[#allocation6 + $0x68] sm:$0xf]
    %v598 = vld [vmem:[#allocation6 + $0x6c] sm:$0xf]
    %v599 = vld [vmem:[#allocation6 + $0x70] sm:$0xf]
    %v600 = vld [vmem:[#allocation6 + $0x74] sm:$0xf]
    %v601 = vld [vmem:[#allocation6 + $0x78] sm:$0xf]
    %v602 = vld [vmem:[#allocation6 + $0x7c] sm:$0xf]
    %v603 = vld [vmem:[#allocation6 + $0x80] sm:$0xf]
    %v604 = vld [vmem:[#allocation6 + $0x84] sm:$0xf]
    %v605 = vld [vmem:[#allocation6 + $0x88] sm:$0xf]
    %v606 = vld [vmem:[#allocation6 + $0x8c] sm:$0xf]
    %v607 = vld [vmem:[#allocation6 + $0x90] sm:$0xf]
    %v608 = vld [vmem:[#allocation6 + $0x94] sm:$0xf]
    %v609 = vld [vmem:[#allocation6 + $0x98] sm:$0xf]
    %v610 = vld [vmem:[#allocation6 + $0x9c] sm:$0xf]
    %v611 = vld [vmem:[#allocation6 + $0xa0] sm:$0xf]
    %v612 = vld [vmem:[#allocation6 + $0xa4] sm:$0xf]
    %v613 = vld [vmem:[#allocation6 + $0xa8] sm:$0xf]
    %v614 = vld [vmem:[#allocation6 + $0xac] sm:$0xf]
    %v615 = vld [vmem:[#allocation6 + $0xb0] sm:$0xf]
    %v616 = vld [vmem:[#allocation6 + $0xb4] sm:$0xf]
    %v617 = vld [vmem:[#allocation6 + $0xb8] sm:$0xf]
    %v618 = vld [vmem:[#allocation6 + $0xbc] sm:$0xf]
    %v619 = vld [vmem:[#allocation6 + $0xc0] sm:$0xf]
    %v620 = vld [vmem:[#allocation6 + $0xc4] sm:$0xf]
    %v621 = vld [vmem:[#allocation6 + $0xc8] sm:$0xf]
    %v622 = vld [vmem:[#allocation6 + $0xcc] sm:$0xf]
    %v623 = vld [vmem:[#allocation6 + $0xd0] sm:$0xf]
    %v624 = vld [vmem:[#allocation6 + $0xd4] sm:$0xf]
    %v625 = vld [vmem:[#allocation6 + $0xd8] sm:$0xf]
    %v626 = vld [vmem:[#allocation6 + $0xdc] sm:$0xf]
    %v627 = vld [vmem:[#allocation6 + $0xe0] sm:$0xf]
    %v628 = vld [vmem:[#allocation6 + $0xe4] sm:$0xf]
    %v629 = vld [vmem:[#allocation6 + $0xe8] sm:$0xf]
    %v630 = vld [vmem:[#allocation6 + $0xec] sm:$0xf]
    %v631 = vld [vmem:[#allocation6 + $0xf0] sm:$0xf]
    %v632 = vld [vmem:[#allocation6 + $0xf4] sm:$0xf]
    %v633 = vld [vmem:[#allocation6 + $0xf8] sm:$0xf]
    %v634 = vld [vmem:[#allocation6 + $0xfc] sm:$0xf]
    %v635 = vld [vmem:[%s5] sm:$0x1]
    %v637 = vperm.slane %v635, 0
    %v703 = vunpack.c.l.b16 %v571
    %v704 = vunpack.c.l.b16 %v572
    %v705 = vunpack.c.l.b16 %v573
    %v706 = vunpack.c.l.b16 %v574
    %v707 = vunpack.c.l.b16 %v575
    %v708 = vunpack.c.l.b16 %v576
    %v709 = vunpack.c.l.b16 %v577
    %v710 = vunpack.c.l.b16 %v578
    %v711 = vunpack.c.l.b16 %v579
    %v712 = vunpack.c.l.b16 %v580
    %v713 = vunpack.c.l.b16 %v581
    %v714 = vunpack.c.l.b16 %v582
    %v715 = vunpack.c.l.b16 %v583
    %v716 = vunpack.c.l.b16 %v584
    %v717 = vunpack.c.l.b16 %v585
    %v718 = vunpack.c.l.b16 %v586
    %v719 = vunpack.c.l.b16 %v587
    %v720 = vunpack.c.l.b16 %v588
    %v721 = vunpack.c.l.b16 %v589
    %v722 = vunpack.c.l.b16 %v590
    %v723 = vunpack.c.l.b16 %v591
    %v724 = vunpack.c.l.b16 %v592
    %v725 = vunpack.c.l.b16 %v593
    %v726 = vunpack.c.l.b16 %v594
    %v727 = vunpack.c.l.b16 %v595
    %v728 = vunpack.c.l.b16 %v596
    %v729 = vunpack.c.l.b16 %v597
    %v730 = vunpack.c.l.b16 %v598
    %v731 = vunpack.c.l.b16 %v599
    %v732 = vunpack.c.l.b16 %v600
    %v733 = vunpack.c.l.b16 %v601
    %v734 = vunpack.c.l.b16 %v602
    %v735 = vunpack.c.l.b16 %v603
    %v736 = vunpack.c.l.b16 %v604
    %v737 = vunpack.c.l.b16 %v605
    %v738 = vunpack.c.l.b16 %v606
    %v739 = vunpack.c.l.b16 %v607
    %v740 = vunpack.c.l.b16 %v608
    %v741 = vunpack.c.l.b16 %v609
    %v742 = vunpack.c.l.b16 %v610
    %v743 = vunpack.c.l.b16 %v611
    %v744 = vunpack.c.l.b16 %v612
    %v745 = vunpack.c.l.b16 %v613
    %v746 = vunpack.c.l.b16 %v614
    %v747 = vunpack.c.l.b16 %v615
    %v748 = vunpack.c.l.b16 %v616
    %v749 = vunpack.c.l.b16 %v617
    %v750 = vunpack.c.l.b16 %v618
    %v751 = vunpack.c.l.b16 %v619
    %v752 = vunpack.c.l.b16 %v620
    %v753 = vunpack.c.l.b16 %v621
    %v754 = vunpack.c.l.b16 %v622
    %v755 = vunpack.c.l.b16 %v623
    %v756 = vunpack.c.l.b16 %v624
    %v757 = vunpack.c.l.b16 %v625
    %v758 = vunpack.c.l.b16 %v626
    %v759 = vunpack.c.l.b16 %v627
    %v760 = vunpack.c.l.b16 %v628
    %v761 = vunpack.c.l.b16 %v629
    %v762 = vunpack.c.l.b16 %v630
    %v763 = vunpack.c.l.b16 %v631
    %v764 = vunpack.c.l.b16 %v632
    %v765 = vunpack.c.l.b16 %v633
    %v766 = vunpack.c.l.b16 %v634
    %v767 = vpack.c.b16 %v704, %v703
    %v768 = vpack.c.b16 %v706, %v705
    %v769 = vpack.c.b16 %v708, %v707
    %v770 = vpack.c.b16 %v710, %v709
    %v771 = vpack.c.b16 %v712, %v711
    %v772 = vpack.c.b16 %v714, %v713
    %v773 = vpack.c.b16 %v716, %v715
    %v774 = vpack.c.b16 %v718, %v717
    %v775 = vpack.c.b16 %v720, %v719
    %v776 = vpack.c.b16 %v722, %v721
    %v777 = vpack.c.b16 %v724, %v723
    %v778 = vpack.c.b16 %v726, %v725
    %v779 = vpack.c.b16 %v728, %v727
    %v780 = vpack.c.b16 %v730, %v729
    %v781 = vpack.c.b16 %v732, %v731
    %v782 = vpack.c.b16 %v734, %v733
    %v783 = vpack.c.b16 %v736, %v735
    %v784 = vpack.c.b16 %v738, %v737
    %v785 = vpack.c.b16 %v740, %v739
    %v786 = vpack.c.b16 %v742, %v741
    %v787 = vpack.c.b16 %v744, %v743
    %v788 = vpack.c.b16 %v746, %v745
    %v789 = vpack.c.b16 %v748, %v747
    %v790 = vpack.c.b16 %v750, %v749
    %v791 = vpack.c.b16 %v752, %v751
    %v792 = vpack.c.b16 %v754, %v753
    %v793 = vpack.c.b16 %v756, %v755
    %v794 = vpack.c.b16 %v758, %v757
    %v795 = vpack.c.b16 %v760, %v759
    %v796 = vpack.c.b16 %v762, %v761
    %v797 = vpack.c.b16 %v764, %v763
    %v798 = vpack.c.b16 %v766, %v765
    %831 = vmatpush.bf16.msra.mxu0 %v774
    %832 = vmatpush.bf16.msra.mxu0 %v773
    %833 = vmatpush.bf16.msra.mxu0 %v772
    %834 = vmatpush.bf16.msra.mxu0 %v771
    %835 = vmatpush.bf16.msra.mxu0 %v770
    %836 = vmatpush.bf16.msra.mxu0 %v769
    %837 = vmatpush.bf16.msra.mxu0 %v768
    %838 = vmatpush.bf16.msra.mxu0 %v767
    %839 = vmatmul.bf16.gmra.mxu0 %v567
    %v840 = vpop.f32.mrf.mxu0
    %v841 = vadd.f32 %v637, %v840
    %v842 = vpop.f32.mrf.mxu0
    %843 = vdwg.mxu0
    %844 = vmatpush.bf16.msra.mxu0 %v782
    %845 = vmatpush.bf16.msra.mxu0 %v781
    %846 = vmatpush.bf16.msra.mxu0 %v780
    %847 = vmatpush.bf16.msra.mxu0 %v779
    %848 = vmatpush.bf16.msra.mxu0 %v778
    %849 = vmatpush.bf16.msra.mxu0 %v777
    %850 = vmatpush.bf16.msra.mxu0 %v776
    %851 = vmatpush.bf16.msra.mxu0 %v775
    %852 = vmatmul.bf16.gmra.mxu0 %v568
    %v853 = vpop.f32.mrf.mxu0
    %v854 = vadd.f32 %v841, %v853
    %v855 = vpop.f32.mrf.mxu0
    %856 = vdwg.mxu0
    %857 = vmatpush.bf16.msra.mxu0 %v790
    %858 = vmatpush.bf16.msra.mxu0 %v789
    %859 = vmatpush.bf16.msra.mxu0 %v788
    %860 = vmatpush.bf16.msra.mxu0 %v787
    %861 = vmatpush.bf16.msra.mxu0 %v786
    %862 = vmatpush.bf16.msra.mxu0 %v785
    %863 = vmatpush.bf16.msra.mxu0 %v784
    %864 = vmatpush.bf16.msra.mxu0 %v783
    %865 = vmatmul.bf16.gmra.mxu0 %v569
    %v866 = vpop.f32.mrf.mxu0
    %v867 = vadd.f32 %v854, %v866
    %v868 = vpop.f32.mrf.mxu0
    %869 = vdwg.mxu0
    %870 = vmatpush.bf16.msra.mxu0 %v798
    %871 = vmatpush.bf16.msra.mxu0 %v797
    %872 = vmatpush.bf16.msra.mxu0 %v796
    %873 = vmatpush.bf16.msra.mxu0 %v795
    %874 = vmatpush.bf16.msra.mxu0 %v794
    %875 = vmatpush.bf16.msra.mxu0 %v793
    %876 = vmatpush.bf16.msra.mxu0 %v792
    %877 = vmatpush.bf16.msra.mxu0 %v791
    %878 = vmatmul.bf16.gmra.mxu0 %v570
    %v879 = vpop.f32.mrf.mxu0
    %v880 = vadd.f32 %v867, %v879
    %v881 = vpop.f32.mrf.mxu0
    %882 = vdwg.mxu0
    %883 = vst [vmem:[#allocation8] sm:$0xff] %v880
    // Predicated region
    $region34: #{fcn_small_forward_padded.1} parent=1 // pred_check
      _
    $region35: #{fcn_small_forward_padded.1} parent=1 // pred_check_branch
      %885 = sbr.rel (0) target = $region37
    $region36: #{fcn_small_forward_padded.1} parent=1 // pred_region
      %887 = vsyncadd [#allocation5], 0
      %s889 = sshll.u32 [#allocation8], 4
      %s890 = int_to_ptr.vmem [resolvable:$true] %s889
      %s891 = sshll.u32 %s6, 4
      %s892 = int_to_ptr.hbm [resolvable:$true] %s891
      %894 = dma.vmem_to_hbm [thread:$0]  %s890, 128, %s892, [#allocation5]
    $region37: #{fcn_small_forward_padded.1} parent=1 // pred_fallthru
      _
    // Predicated region
    $region38: #{fcn_small_forward_padded.1} parent=1 // pred_check
      _
    $region39: #{fcn_small_forward_padded.1} parent=1 // pred_check_branch
      %896 = sbr.rel (0) target = $region41
    $region40: #{fcn_small_forward_padded.1} parent=1 // pred_region
      %898 = dma.done [#allocation5], 128
    $region41: #{fcn_small_forward_padded.1} parent=1 // pred_fallthru
      _
    %899 = vsyncpa [#allocation4], 1
    %900 = vsyncpa [#allocation7], 1
    %901 = vsyncpa [#allocation5], 1

</llo_original>
